<compile_context>
chip_gen: v6e
topology: v6e:2x2x1
jax: 0.10.0
libtpu: 0.0.40
codegen_flags: <defaults>
</compile_context>

<pallas_src>
import jax
import jax.numpy as jnp
from jax.experimental import pallas as pl
from jax.experimental.pallas import tpu as pltpu

BN_EPS = 1e-5


# ------------------------------- kernels ------------------------------------


def _stats_kernel(x_ref, w_ref, sum_ref, sq_ref):
    """Pass 1 (re-read plan): accumulate lane-blocked sum(y), sum(y^2) of y = W @ x."""
    i = pl.program_id(1)

    @pl.when(i == 0)
    def _():
        sum_ref[...] = jnp.zeros_like(sum_ref)
        sq_ref[...] = jnp.zeros_like(sq_ref)

    w = w_ref[...]
    s = jnp.zeros_like(sum_ref)
    q = jnp.zeros_like(sq_ref)
    for b in range(x_ref.shape[0]):
        y = jnp.dot(w, x_ref[b].astype(jnp.float32),
                    preferred_element_type=jnp.float32)
        s = s + y
        q = q + y * y
    sum_ref[...] += s
    sq_ref[...] += q


def _stats_write_y_kernel(x_ref, w_ref, y_ref, sum_ref, sq_ref):
    """Pass 1 (write-y plan): also store un-normalized y so pass 2 never re-reads x."""
    i = pl.program_id(1)

    @pl.when(i == 0)
    def _():
        sum_ref[...] = jnp.zeros_like(sum_ref)
        sq_ref[...] = jnp.zeros_like(sq_ref)

    w = w_ref[...]
    s = jnp.zeros_like(sum_ref)
    q = jnp.zeros_like(sq_ref)
    for b in range(x_ref.shape[0]):
        y = jnp.dot(w, x_ref[b].astype(jnp.float32),
                    preferred_element_type=jnp.float32)
        y_ref[b] = y.astype(y_ref.dtype)
        s = s + y
        q = q + y * y
    sum_ref[...] += s
    sq_ref[...] += q


def _conv_affine_relu_kernel(x_ref, ws_ref, shift_ref, o_ref):
    """Pass 2 (re-read plan): out = relu(w_scaled @ x + shift)."""
    ws = ws_ref[...]
    shift = shift_ref[...]                      # (Cout, 1), broadcasts over lanes
    for b in range(x_ref.shape[0]):
        y = jnp.dot(ws, x_ref[b].astype(jnp.float32),
                    preferred_element_type=jnp.float32) + shift
        o_ref[b] = jnp.maximum(y, 0.0).astype(o_ref.dtype)


def _affine_relu_kernel(y_ref, scale_ref, shift_ref, o_ref):
    """Pass 2 (write-y plan): out = relu(y * scale + shift), in place over y."""
    y = y_ref[...].astype(jnp.float32)          # (nb, Cout, tile_m)
    o_ref[...] = jnp.maximum(
        y * scale_ref[...] + shift_ref[...], 0.0).astype(o_ref.dtype)


# ------------------------------- planning -----------------------------------


def _vmem_budget_bytes():
    try:
        cap = pltpu.get_tpu_info().vmem_capacity_bytes
    except Exception:
        cap = 64 << 20                          # safe for every chip generation
    return int(cap * 0.70)


def _round_down_128(v):
    return max(128, (v // 128) * 128)


def _plan(N, Cin, Cout, HW, x_bytes, budget):
    """Pick (batch items per block, lanes per tile, padded HW) from a VMEM budget."""
    HW128 = -(-HW // 128) * 128

    def max_tile(nb):
        # double-buffered x block + double-buffered out block (counted at f32 Cout)
        # + two resident f32 accumulators (x2 buffers), per lane column.
        per_lane = 2 * nb * (Cin * x_bytes + Cout * 4) + 4 * Cout * 4
        fixed = 2 * Cout * Cin * 4 + (4 << 20)  # weight (double buffered) + headroom
        avail = budget - fixed
        t = _round_down_128(avail // per_lane) if avail > 0 else 128
        return min(t, HW128)

    tile_m = max_tile(1)
    nb = 1
    # Small-shape path: pack batch items so each grid step moves >= ~1 MiB.
    if N > 1 and Cin * tile_m * x_bytes < (1 << 20):
        for d in range(1, N + 1):
            if N % d:
                continue
            nb = d
            if d * Cin * tile_m * x_bytes >= (1 << 20):
                break
        tile_m = min(tile_m, max_tile(nb))
    HW_pad = -(-HW // tile_m) * tile_m
    return nb, tile_m, HW_pad


# ------------------------------- wrapper ------------------------------------


def aspp_forward(x_nchw, weight_oihw, gamma, beta):
    """x_nchw: (N, Cin, H, W); weight_oihw: (Cout, Cin, 1, 1); gamma/beta: (Cout,)."""
    N, Cin, H, W = x_nchw.shape
    Cout = weight_oihw.shape[0]
    HW = H * W
    out_dtype = x_nchw.dtype

    budget = _vmem_budget_bytes()
    nb, tile_m, HW_pad = _plan(N, Cin, Cout, HW,
                               jnp.dtype(x_nchw.dtype).itemsize, budget)
    G = N // nb
    num_tiles = HW_pad // tile_m

    # Lane-dense: channels on sublanes, spatial on lanes. No transpose, no upcast.
    x = x_nchw.reshape(N, Cin, HW)
    if HW_pad != HW:
        x = jnp.pad(x, ((0, 0), (0, 0), (0, HW_pad - HW)))
    w = weight_oihw[:, :, 0, 0].astype(jnp.float32)        # (Cout, Cin), tiny

    cp_stats = pltpu.CompilerParams(
        dimension_semantics=("parallel", "arbitrary"),
        vmem_limit_bytes=budget,
    )
    cp_par = pltpu.CompilerParams(
        dimension_semantics=("parallel", "parallel"),
        vmem_limit_bytes=budget,
    )

    x_spec = pl.BlockSpec((nb, Cin, tile_m), lambda g, i: (g, 0, i))
    w_spec = pl.BlockSpec((Cout, Cin), lambda g, i: (0, 0))
    col_spec = pl.BlockSpec((Cout, 1), lambda g, i: (0, 0))
    part_spec = pl.BlockSpec((None, Cout, tile_m), lambda g, i: (g, 0, 0))
    out_spec = pl.BlockSpec((nb, Cout, tile_m), lambda g, i: (g, 0, i))

    part_shape = jax.ShapeDtypeStruct((G, Cout, tile_m), jnp.float32)

    # Traffic-optimal plan for the typical ASPP 2048->256 case.
    write_y = Cin >= 2 * Cout

    if write_y:
        y, sum_part, sq_part = pl.pallas_call(
            _stats_write_y_kernel,
            out_shape=(jax.ShapeDtypeStruct((N, Cout, HW_pad), out_dtype),
                       part_shape, part_shape),
            grid=(G, num_tiles),
            in_specs=[x_spec, w_spec],
            out_specs=(out_spec, part_spec, part_spec),
            compiler_params=cp_stats,
        )(x, w)
    else:
        sum_part, sq_part = pl.pallas_call(
            _stats_kernel,
            out_shape=(part_shape, part_shape),
            grid=(G, num_tiles),
            in_specs=[x_spec, w_spec],
            out_specs=(part_spec, part_spec),
            compiler_params=cp_stats,
        )(x, w)

    # ---- tiny (Cout,) finalize in plain JAX ----
    m = jnp.float32(N * HW)                      # true count; zero padding contributes 0
    sum_y = jnp.sum(sum_part, axis=(0, 2))
    sumsq_y = jnp.sum(sq_part, axis=(0, 2))
    mean = sum_y / m
    var = jnp.maximum(sumsq_y / m - mean * mean, 0.0)      # biased batch variance
    inv_std = jax.lax.rsqrt(var + BN_EPS)
    scale = gamma.astype(jnp.float32) * inv_std            # (Cout,)
    shift = (beta.astype(jnp.float32) - mean * scale)[:, None]   # (Cout, 1)

    if write_y:
        out = pl.pallas_call(
            _affine_relu_kernel,
            out_shape=jax.ShapeDtypeStruct((N, Cout, HW_pad), out_dtype),
            grid=(G, num_tiles),
            in_specs=[out_spec, col_spec, col_spec],
            out_specs=out_spec,
            compiler_params=cp_par,
            input_output_aliases={0: 0},         # normalize y in place
        )(y, scale[:, None], shift)
    else:
        w_scaled = scale[:, None] * w            # fold gamma * inv_std into the conv weight
        out = pl.pallas_call(
            _conv_affine_relu_kernel,
            out_shape=jax.ShapeDtypeStruct((N, Cout, HW_pad), out_dtype),
            grid=(G, num_tiles),
            in_specs=[x_spec, w_spec, col_spec],
            out_specs=out_spec,
            compiler_params=cp_par,
        )(x, w_scaled, shift)

    return out[:, :, :HW].reshape(N, Cout, H, W)


# ------------------------------- reference ----------------------------------


def aspp_reference(x_nchw, weight_oihw, gamma, beta):
    """Pure-JAX reference: Conv2d(1x1, bias=False) + BatchNorm2d(train) + ReLU."""
    N, Cin, H, W = x_nchw.shape
    Cout = weight_oihw.shape[0]
    x = jnp.transpose(x_nchw, (0, 2, 3, 1)).reshape(-1, Cin).astype(jnp.float32)
    w = jnp.transpose(weight_oihw[:, :, 0, 0], (1, 0)).astype(jnp.float32)
    y = x @ w
    mean = jnp.mean(y, axis=0, keepdims=True)
    var = jnp.mean((y - mean) ** 2, axis=0, keepdims=True)
    y = (y - mean) / jnp.sqrt(var + BN_EPS)
    y = y * gamma.reshape(1, -1) + beta.reshape(1, -1)
    y = jnp.maximum(y, 0.0)
    return y.reshape(N, H, W, Cout).transpose(0, 3, 1, 2)


if __name__ == "__main__":
    key = jax.random.PRNGKey(0)

    # Case 1: Cin <  2*Cout -> re-read plan   (batch=2, in=4,  out=8, spatial=16)
    # Case 2: Cin >= 2*Cout -> write-y plan   (batch=2, in=32, out=8, spatial=16)
    cases = [(2, 4, 8, 16, 16), (2, 32, 8, 16, 16)]
    ok = True
    for (N, Cin, Cout, H, W) in cases:
        k_x, k_w, k_g, k_b, key = jax.random.split(key, 5)
        x = jax.random.normal(k_x, (N, Cin, H, W), dtype=jnp.float32)
        weight = jax.random.normal(k_w, (Cout, Cin, 1, 1), dtype=jnp.float32) * 0.1
        gamma = 1.0 + 0.1 * jax.random.normal(k_g, (Cout,), dtype=jnp.float32)
        beta = 0.1 * jax.random.normal(k_b, (Cout,), dtype=jnp.float32)

        out = jax.block_until_ready(aspp_forward(x, weight, gamma, beta))
        ref = aspp_reference(x, weight, gamma, beta)
        assert out.shape == (N, Cout, H, W), out.shape
        ok = ok and bool(jnp.allclose(out, ref, atol=2e-4, rtol=2e-4))

    assert ok, "mismatch vs reference"
    print("KERNEL_OK")
</pallas_src>

<mosaic_0001>
module attributes {stable_mosaic.version = 11 : i64} {
  func.func @_stats_kernel(%arg0: i32, %arg1: i32, %arg2: memref<2x4x256xf32, #tpu.memory_space<vmem>>, %arg3: memref<8x4xf32, #tpu.memory_space<vmem>>, %arg4: memref<1x8x256xf32, #tpu.memory_space<vmem>>, %arg5: memref<1x8x256xf32, #tpu.memory_space<vmem>>) attributes {dimension_semantics = [#tpu.dimension_semantics<parallel>, #tpu.dimension_semantics<arbitrary>], iteration_bounds = array<i64: 1, 1>, scalar_prefetch = 0 : i64, scratch_operands = 0 : i64, tpu.core_type = #tpu.core_type<tc>, window_params = [{transform_indices = @transform_0, window_bounds = array<i64: 2, 4, 256>}, {pipeline_mode = #tpu.pipeline_mode<synchronous>, transform_indices = @transform_1, window_bounds = array<i64: 8, 4>}, {transform_indices = @transform_2, window_bounds = array<i64: 1, 8, 256>}, {transform_indices = @transform_3, window_bounds = array<i64: 1, 8, 256>}]} {
    %c0_i32 = arith.constant 0 : i32
    %0 = arith.cmpi eq, %arg1, %c0_i32 : i32
    %1 = arith.extui %0 : i1 to i32
    %c0_i32_0 = arith.constant 0 : i32
    %2 = arith.cmpi ne, %1, %c0_i32_0 : i32
    scf.if %2 {
      %cst_22 = arith.constant 0.000000e+00 : f32
      %30 = vector.broadcast %cst_22 : f32 to vector<8x256xf32>
      %c0_23 = arith.constant 0 : index
      %c0_24 = arith.constant 0 : index
      %c0_25 = arith.constant 0 : index
      %31 = vector.load %arg4[%c0_23, %c0_24, %c0_25] : memref<1x8x256xf32, #tpu.memory_space<vmem>>, vector<1x8x256xf32>
      %32 = vector.shape_cast %31 : vector<1x8x256xf32> to vector<8x256xf32>
      %33 = vector.shape_cast %30 : vector<8x256xf32> to vector<1x8x256xf32>
      tpu.vector_store %arg4[%c0_23, %c0_24, %c0_25], %33 {strides = array<i32>} : memref<1x8x256xf32, #tpu.memory_space<vmem>>, vector<1x8x256xf32>,
      %cst_26 = arith.constant 0.000000e+00 : f32
      %34 = vector.broadcast %cst_26 : f32 to vector<8x256xf32>
      %c0_27 = arith.constant 0 : index
      %c0_28 = arith.constant 0 : index
      %c0_29 = arith.constant 0 : index
      %35 = vector.load %arg5[%c0_27, %c0_28, %c0_29] : memref<1x8x256xf32, #tpu.memory_space<vmem>>, vector<1x8x256xf32>
      %36 = vector.shape_cast %35 : vector<1x8x256xf32> to vector<8x256xf32>
      %37 = vector.shape_cast %34 : vector<8x256xf32> to vector<1x8x256xf32>
      tpu.vector_store %arg5[%c0_27, %c0_28, %c0_29], %37 {strides = array<i32>} : memref<1x8x256xf32, #tpu.memory_space<vmem>>, vector<1x8x256xf32>,
    } else {
    }
    %c0 = arith.constant 0 : index
    %c0_1 = arith.constant 0 : index
    %3 = vector.load %arg3[%c0, %c0_1] : memref<8x4xf32, #tpu.memory_space<vmem>>, vector<8x4xf32>
    %cst = arith.constant 0.000000e+00 : f32
    %4 = vector.broadcast %cst : f32 to vector<8x256xf32>
    %cst_2 = arith.constant 0.000000e+00 : f32
    %5 = vector.broadcast %cst_2 : f32 to vector<8x256xf32>
    %c0_3 = arith.constant 0 : index
    %c0_4 = arith.constant 0 : index
    %c0_5 = arith.constant 0 : index
    %6 = vector.load %arg2[%c0_3, %c0_4, %c0_5] : memref<2x4x256xf32, #tpu.memory_space<vmem>>, vector<1x4x256xf32>
    %7 = vector.shape_cast %6 : vector<1x4x256xf32> to vector<4x256xf32>
    %cst_6 = arith.constant dense<0.000000e+00> : vector<8x256xf32>
    %8 = tpu.matmul %3, %7, %cst_6 {dimension_numbers = #tpu.dot_dimension_numbers<[1], [0], [0], [1], [0, 0, 1, 1], [], []>} : vector<8x4xf32>, vector<4x256xf32>, vector<8x256xf32> -> vector<8x256xf32>
    %9 = arith.addf %4, %8 : vector<8x256xf32>
    %10 = arith.mulf %8, %8 : vector<8x256xf32>
    %11 = arith.addf %5, %10 : vector<8x256xf32>
    %c1 = arith.constant 1 : index
    %c0_7 = arith.constant 0 : index
    %c0_8 = arith.constant 0 : index
    %12 = vector.load %arg2[%c1, %c0_7, %c0_8] : memref<2x4x256xf32, #tpu.memory_space<vmem>>, vector<1x4x256xf32>
    %13 = vector.shape_cast %12 : vector<1x4x256xf32> to vector<4x256xf32>
    %cst_9 = arith.constant dense<0.000000e+00> : vector<8x256xf32>
    %14 = tpu.matmul %3, %13, %cst_9 {dimension_numbers = #tpu.dot_dimension_numbers<[1], [0], [0], [1], [0, 0, 1, 1], [], []>} : vector<8x4xf32>, vector<4x256xf32>, vector<8x256xf32> -> vector<8x256xf32>
    %15 = arith.addf %9, %14 : vector<8x256xf32>
    %16 = arith.mulf %14, %14 : vector<8x256xf32>
    %17 = arith.addf %11, %16 : vector<8x256xf32>
    %c0_10 = arith.constant 0 : index
    %c0_11 = arith.constant 0 : index
    %c0_12 = arith.constant 0 : index
    %18 = vector.load %arg4[%c0_10, %c0_11, %c0_12] : memref<1x8x256xf32, #tpu.memory_space<vmem>>, vector<1x8x256xf32>
    %19 = vector.shape_cast %18 : vector<1x8x256xf32> to vector<8x256xf32>
    %20 = arith.addf %19, %15 : vector<8x256xf32>
    %c0_13 = arith.constant 0 : index
    %c0_14 = arith.constant 0 : index
    %c0_15 = arith.constant 0 : index
    %21 = vector.load %arg4[%c0_13, %c0_14, %c0_15] : memref<1x8x256xf32, #tpu.memory_space<vmem>>, vector<1x8x256xf32>
    %22 = vector.shape_cast %21 : vector<1x8x256xf32> to vector<8x256xf32>
    %23 = vector.shape_cast %20 : vector<8x256xf32> to vector<1x8x256xf32>
    tpu.vector_store %arg4[%c0_13, %c0_14, %c0_15], %23 {strides = array<i32>} : memref<1x8x256xf32, #tpu.memory_space<vmem>>, vector<1x8x256xf32>,
    %c0_16 = arith.constant 0 : index
    %c0_17 = arith.constant 0 : index
    %c0_18 = arith.constant 0 : index
    %24 = vector.load %arg5[%c0_16, %c0_17, %c0_18] : memref<1x8x256xf32, #tpu.memory_space<vmem>>, vector<1x8x256xf32>
    %25 = vector.shape_cast %24 : vector<1x8x256xf32> to vector<8x256xf32>
    %26 = arith.addf %25, %17 : vector<8x256xf32>
    %c0_19 = arith.constant 0 : index
    %c0_20 = arith.constant 0 : index
    %c0_21 = arith.constant 0 : index
    %27 = vector.load %arg5[%c0_19, %c0_20, %c0_21] : memref<1x8x256xf32, #tpu.memory_space<vmem>>, vector<1x8x256xf32>
    %28 = vector.shape_cast %27 : vector<1x8x256xf32> to vector<8x256xf32>
    %29 = vector.shape_cast %26 : vector<8x256xf32> to vector<1x8x256xf32>
    tpu.vector_store %arg5[%c0_19, %c0_20, %c0_21], %29 {strides = array<i32>} : memref<1x8x256xf32, #tpu.memory_space<vmem>>, vector<1x8x256xf32>,
    return
  }
  func.func @transform_0(%arg0: i32, %arg1: i32) -> (i32, i32, i32) {
    %c0_i32 = arith.constant 0 : i32
    %c0_i32_0 = arith.constant 0 : i32
    return %arg0, %c0_i32, %arg1 : i32, i32, i32
  }
  func.func @transform_1(%arg0: i32, %arg1: i32) -> (i32, i32) {
    %c0_i32 = arith.constant 0 : i32
    %c0_i32_0 = arith.constant 0 : i32
    %c0_i32_1 = arith.constant 0 : i32
    return %c0_i32, %c0_i32_0 : i32, i32
  }
  func.func @transform_2(%arg0: i32, %arg1: i32) -> (i32, i32, i32) {
    %c0_i32 = arith.constant 0 : i32
    %c0_i32_0 = arith.constant 0 : i32
    %c0_i32_1 = arith.constant 0 : i32
    return %arg0, %c0_i32, %c0_i32_0 : i32, i32, i32
  }
  func.func @transform_3(%arg0: i32, %arg1: i32) -> (i32, i32, i32) {
    %c0_i32 = arith.constant 0 : i32
    %c0_i32_0 = arith.constant 0 : i32
    %c0_i32_1 = arith.constant 0 : i32
    return %arg0, %c0_i32, %c0_i32_0 : i32, i32, i32
  }
}

</mosaic_0001>

<llo_original>
// kernel: tpu_custom_call.1
$region0: #{tpu_custom_call.1}
  #allocation0 [shape = 'u32[]', space=smem, size = 0x4, offset = 0x4, fixed_abs, tag = 'smem constant byte address 0x4 - core index']
  #allocation1 [shape = 'u32[144,128]{1,0:T(1,128)}', space=vmem, size = 0x12000, scoped, tag = 'internal scratch']
  %s0 = inlined_call_operand.hbm [shape: f32[2,4,256], index: 0, kind: input, shape index: {}]
  %s1 = inlined_call_operand.vmem [shape: f32[8,4], index: 1, kind: input, shape index: {}]
  %s2 = inlined_call_operand.hbm [shape: f32[1,8,256], index: 2, kind: output, shape index: {0}]
  %s3 = inlined_call_operand.hbm [shape: f32[1,8,256], index: 3, kind: output, shape index: {1}]
  %4 = xla_tuple %s2, %s3
  %s5 = sld [smem:[#allocation0]]
  $region34: #{tpu_custom_call.1} parent=0
    _
  %s7 = ssub.s32 1, %s5
  %s8 = scalar_select 0, %s7, %s5
  $region1: #{tpu_custom_call.1} parent=0
    #allocation2 [shape = 'u8[8192]{0}', space=vmem, size = 0x2000, scoped, tag = 'input window, operand 0, single buffered']
    #allocation3 [shape = 's32[1]{0}', space=sflag, size = 0x4, scoped, tag = 'scoped memory for tpu_custom_call.1']
    #allocation4 [shape = 's32[1]{0}', space=sflag, size = 0x4, scoped, tag = 'scoped memory for tpu_custom_call.1']
    #allocation5 [shape = 'u8[8192]{0}', space=vmem, size = 0x2000, scoped, tag = 'output window, operand 0, single buffered']
    #allocation6 [shape = 'u8[8192]{0}', space=vmem, size = 0x2000, scoped, tag = 'output window, operand 1, single buffered']
    #allocation7 [shape = 's32[1]{0}', space=sflag, size = 0x4, scoped, tag = 'scoped memory for tpu_custom_call.1']
    %9 = vsyncpa [#allocation3], 0
    %10 = vsyncpa [#allocation4], 0
    %11 = vsyncpa [#allocation7], 0
    // Predicated region
    $region2: #{tpu_custom_call.1} parent=1 // pred_check
      _
    $region3: #{tpu_custom_call.1} parent=1 // pred_check_branch
      %13 = sbr.rel (0) target = $region5
    $region4: #{tpu_custom_call.1} parent=1 // pred_region
      %s15 = ssub.s32 256, 256
      %16 = vsyncadd [#allocation3], %s15
      %s17 = sshll.u32 [#allocation2], 4
      %s18 = int_to_ptr.vmem [resolvable:$true] %s17
      %23 = dma.hbm_to_vmem [thread:$0]  %s0, 256, %s18, [#allocation3], 128, 128, 8
    $region5: #{tpu_custom_call.1} parent=1 // pred_fallthru
      _
    // Predicated region
    $region6: #{tpu_custom_call.1} parent=1 // pred_check
      _
    $region7: #{tpu_custom_call.1} parent=1 // pred_check_branch
      %25 = sbr.rel (0) target = $region9
    $region8: #{tpu_custom_call.1} parent=1 // pred_region
      _
    $region9: #{tpu_custom_call.1} parent=1 // pred_fallthru
      _
    // Predicated region
    $region10: #{tpu_custom_call.1} parent=1 // pred_check
      _
    $region11: #{tpu_custom_call.1} parent=1 // pred_check_branch
      %27 = sbr.rel (0) target = $region13
    $region12: #{tpu_custom_call.1} parent=1 // pred_region
      %28 = dma.done [#allocation3], 256
    $region13: #{tpu_custom_call.1} parent=1 // pred_fallthru
      _
    %p29 = scmp.eq.s32.totalorder 0, 0
    // Predicated region
    $region14: #{tpu_custom_call.1} parent=1 // pred_check
      %p30 = pneg %p29
    $region15: #{tpu_custom_call.1} parent=1 // pred_check_branch
      %32 = sbr.rel (%p30) target = $region17
    $region16: #{tpu_custom_call.1} parent=1 // pred_region
      %33 = vst [vmem:[#allocation5] sm:$0xff] 0.0
      %34 = vst [vmem:[#allocation5 + $0x8] sm:$0xff] 0.0
      %35 = vst [vmem:[#allocation6] sm:$0xff] 0.0
      %36 = vst [vmem:[#allocation6 + $0x8] sm:$0xff] 0.0
    $region17: #{tpu_custom_call.1} parent=1 // pred_fallthru
      _
    %v37 = vld [vmem:[%s1] sm:$0xff]
    %v38 = vld [vmem:[#allocation2] sm:$0xff]
    %v40 = vcombine.high %v38, %v38
    %vm41 = vcmask 31744
    %v43 = vsel %vm41, %v37, 0
    %vm45 = vcmask 1043456
    %v46 = vsel %vm45, %v38, 0
    %v48 = vsel %vm45, %v40, 0
    %50 = vmatprep.subr.mxu0 0.0
    %51 = vmatpush1.msra.mxu0 0.0
    %52 = vmatprep.subr.mxu0 0.0
    %53 = vmatpush1.msra.mxu0 0.0
    %54 = vmatprep.subr.mxu0 0.0
    %55 = vmatpush1.msra.mxu0 0.0
    %56 = vmatprep.subr.mxu0 0.0
    %57 = vmatpush1.msra.mxu0 0.0
    %58 = vmatprep.subr.mxu0 0.0
    %59 = vmatpush1.msra.mxu0 0.0
    %60 = vmatprep.subr.mxu0 0.0
    %61 = vmatpush1.msra.mxu0 0.0
    %62 = vmatprep.subr.mxu0 0.0
    %63 = vmatpush1.msra.mxu0 0.0
    %64 = vmatprep.subr.mxu0 0.0
    %65 = vmatpush1.msra.mxu0 0.0
    %66 = vmatprep.subr.mxu0 0.0
    %67 = vmatpush1.msra.mxu0 0.0
    %68 = vmatprep.subr.mxu0 0.0
    %69 = vmatpush1.msra.mxu0 0.0
    %70 = vmatprep.subr.mxu0 0.0
    %71 = vmatpush1.msra.mxu0 0.0
    %72 = vmatprep.subr.mxu0 0.0
    %73 = vmatpush1.msra.mxu0 0.0
    %74 = vmatprep.subr.mxu0 0.0
    %75 = vmatpush1.msra.mxu0 0.0
    %76 = vmatprep.subr.mxu0 0.0
    %77 = vmatpush1.msra.mxu0 0.0
    %78 = vmatprep.subr.mxu0 0.0
    %79 = vmatpush1.msra.mxu0 0.0
    %80 = vmatprep.subr.mxu0 %v48
    %81 = vmatpush1.msra.mxu0 %v46
    %82 = vmatprep.subr.mxu0 0.0
    %83 = vmatpush2.msra.mxu0 0.0
    %84 = vmatprep.subr.mxu0 0.0
    %85 = vmatpush2.msra.mxu0 0.0
    %86 = vmatprep.subr.mxu0 0.0
    %87 = vmatpush2.msra.mxu0 0.0
    %88 = vmatprep.subr.mxu0 0.0
    %89 = vmatpush2.msra.mxu0 0.0
    %90 = vmatprep.subr.mxu0 0.0
    %91 = vmatpush2.msra.mxu0 0.0
    %92 = vmatprep.subr.mxu0 0.0
    %93 = vmatpush2.msra.mxu0 0.0
    %94 = vmatprep.subr.mxu0 0.0
    %95 = vmatpush2.msra.mxu0 0.0
    %96 = vmatprep.subr.mxu0 0.0
    %97 = vmatpush2.msra.mxu0 0.0
    %98 = vmatprep.subr.mxu0 0.0
    %99 = vmatpush2.msra.mxu0 0.0
    %100 = vmatprep.subr.mxu0 0.0
    %101 = vmatpush2.msra.mxu0 0.0
    %102 = vmatprep.subr.mxu0 0.0
    %103 = vmatpush2.msra.mxu0 0.0
    %104 = vmatprep.subr.mxu0 0.0
    %105 = vmatpush2.msra.mxu0 0.0
    %106 = vmatprep.subr.mxu0 0.0
    %107 = vmatpush2.msra.mxu0 0.0
    %108 = vmatprep.subr.mxu0 0.0
    %109 = vmatpush2.msra.mxu0 0.0
    %110 = vmatprep.subr.mxu0 0.0
    %111 = vmatpush2.msra.mxu0 0.0
    %112 = vmatprep.subr.mxu0 0.0
    %113 = vmatpush2.msra.mxu0 0.0
    %114 = vmatprep.mubr.f32.mxu0 0.0
    %115 = vmatmul.mubr.f32.gmra.mxu0 %v43
    %v116 = vpop.f32.mrf.mxu0
    %v117 = vadd.f32 0.0, %v116
    %v118 = vpop.f32.mrf.mxu0
    %v119 = vadd.f32 0.0, %v118
    %120 = vdwg.mxu0
    %v121 = vadd.f32 %v117, 0.0
    %v122 = vadd.f32 %v119, 0.0
    %v123 = vmul.f32 %v117, %v117
    %v124 = vmul.f32 %v119, %v119
    %v125 = vadd.f32 %v123, 0.0
    %v126 = vadd.f32 %v124, 0.0
    %s127 = scalar_lea.vmem [#allocation2], 8
    %v128 = vld [vmem:[%s127] sm:$0xff]
    %v130 = vcombine.high %v128, %v128
    %v131 = vsel %vm45, %v128, 0
    %v133 = vsel %vm45, %v130, 0
    %135 = vmatprep.subr.mxu0 0.0
    %136 = vmatpush1.msra.mxu0 0.0
    %137 = vmatprep.subr.mxu0 0.0
    %138 = vmatpush1.msra.mxu0 0.0
    %139 = vmatprep.subr.mxu0 0.0
    %140 = vmatpush1.msra.mxu0 0.0
    %141 = vmatprep.subr.mxu0 0.0
    %142 = vmatpush1.msra.mxu0 0.0
    %143 = vmatprep.subr.mxu0 0.0
    %144 = vmatpush1.msra.mxu0 0.0
    %145 = vmatprep.subr.mxu0 0.0
    %146 = vmatpush1.msra.mxu0 0.0
    %147 = vmatprep.subr.mxu0 0.0
    %148 = vmatpush1.msra.mxu0 0.0
    %149 = vmatprep.subr.mxu0 0.0
    %150 = vmatpush1.msra.mxu0 0.0
    %151 = vmatprep.subr.mxu0 0.0
    %152 = vmatpush1.msra.mxu0 0.0
    %153 = vmatprep.subr.mxu0 0.0
    %154 = vmatpush1.msra.mxu0 0.0
    %155 = vmatprep.subr.mxu0 0.0
    %156 = vmatpush1.msra.mxu0 0.0
    %157 = vmatprep.subr.mxu0 0.0
    %158 = vmatpush1.msra.mxu0 0.0
    %159 = vmatprep.subr.mxu0 0.0
    %160 = vmatpush1.msra.mxu0 0.0
    %161 = vmatprep.subr.mxu0 0.0
    %162 = vmatpush1.msra.mxu0 0.0
    %163 = vmatprep.subr.mxu0 0.0
    %164 = vmatpush1.msra.mxu0 0.0
    %165 = vmatprep.subr.mxu0 %v133
    %166 = vmatpush1.msra.mxu0 %v131
    %167 = vmatprep.subr.mxu0 0.0
    %168 = vmatpush2.msra.mxu0 0.0
    %169 = vmatprep.subr.mxu0 0.0
    %170 = vmatpush2.msra.mxu0 0.0
    %171 = vmatprep.subr.mxu0 0.0
    %172 = vmatpush2.msra.mxu0 0.0
    %173 = vmatprep.subr.mxu0 0.0
    %174 = vmatpush2.msra.mxu0 0.0
    %175 = vmatprep.subr.mxu0 0.0
    %176 = vmatpush2.msra.mxu0 0.0
    %177 = vmatprep.subr.mxu0 0.0
    %178 = vmatpush2.msra.mxu0 0.0
    %179 = vmatprep.subr.mxu0 0.0
    %180 = vmatpush2.msra.mxu0 0.0
    %181 = vmatprep.subr.mxu0 0.0
    %182 = vmatpush2.msra.mxu0 0.0
    %183 = vmatprep.subr.mxu0 0.0
    %184 = vmatpush2.msra.mxu0 0.0
    %185 = vmatprep.subr.mxu0 0.0
    %186 = vmatpush2.msra.mxu0 0.0
    %187 = vmatprep.subr.mxu0 0.0
    %188 = vmatpush2.msra.mxu0 0.0
    %189 = vmatprep.subr.mxu0 0.0
    %190 = vmatpush2.msra.mxu0 0.0
    %191 = vmatprep.subr.mxu0 0.0
    %192 = vmatpush2.msra.mxu0 0.0
    %193 = vmatprep.subr.mxu0 0.0
    %194 = vmatpush2.msra.mxu0 0.0
    %195 = vmatprep.subr.mxu0 0.0
    %196 = vmatpush2.msra.mxu0 0.0
    %197 = vmatprep.subr.mxu0 0.0
    %198 = vmatpush2.msra.mxu0 0.0
    %199 = vmatprep.mubr.f32.mxu0 0.0
    %200 = vmatmul.mubr.f32.gmra.mxu0 %v43
    %v201 = vpop.f32.mrf.mxu0
    %v202 = vadd.f32 0.0, %v201
    %v203 = vpop.f32.mrf.mxu0
    %v204 = vadd.f32 0.0, %v203
    %205 = vdwg.mxu0
    %v206 = vadd.f32 %v121, %v202
    %v207 = vadd.f32 %v122, %v204
    %v208 = vmul.f32 %v202, %v202
    %v209 = vmul.f32 %v204, %v204
    %v210 = vadd.f32 %v125, %v208
    %v211 = vadd.f32 %v126, %v209
    %v212 = vld [vmem:[#allocation5] sm:$0xff]
    %v213 = vld [vmem:[#allocation5 + $0x8] sm:$0xff]
    %v214 = vadd.f32 %v212, %v206
    %v215 = vadd.f32 %v213, %v207
    %216 = vst [vmem:[#allocation5] sm:$0xff] %v214
    %217 = vst [vmem:[#allocation5 + $0x8] sm:$0xff] %v215
    %v218 = vld [vmem:[#allocation6] sm:$0xff]
    %v219 = vld [vmem:[#allocation6 + $0x8] sm:$0xff]
    %v220 = vadd.f32 %v218, %v210
    %v221 = vadd.f32 %v219, %v211
    %222 = vst [vmem:[#allocation6] sm:$0xff] %v220
    %223 = vst [vmem:[#allocation6 + $0x8] sm:$0xff] %v221
    // Predicated region
    $region18: #{tpu_custom_call.1} parent=1 // pred_check
      _
    $region19: #{tpu_custom_call.1} parent=1 // pred_check_branch
      %225 = sbr.rel (0) target = $region21
    $region20: #{tpu_custom_call.1} parent=1 // pred_region
      %s227 = ssub.s32 256, 256
      %228 = vsyncadd [#allocation4], %s227
      %s230 = sshll.u32 [#allocation5], 4
      %s231 = int_to_ptr.vmem [resolvable:$true] %s230
      %233 = dma.vmem_to_hbm [thread:$0]  %s231, 256, %s2, [#allocation4]
    $region21: #{tpu_custom_call.1} parent=1 // pred_fallthru
      _
    // Predicated region
    $region22: #{tpu_custom_call.1} parent=1 // pred_check
      _
    $region23: #{tpu_custom_call.1} parent=1 // pred_check_branch
      %235 = sbr.rel (0) target = $region25
    $region24: #{tpu_custom_call.1} parent=1 // pred_region
      %s237 = ssub.s32 256, 256
      %238 = vsyncadd [#allocation7], %s237
      %s240 = sshll.u32 [#allocation6], 4
      %s241 = int_to_ptr.vmem [resolvable:$true] %s240
      %243 = dma.vmem_to_hbm [thread:$0]  %s241, 256, %s3, [#allocation7]
    $region25: #{tpu_custom_call.1} parent=1 // pred_fallthru
      _
    // Predicated region
    $region26: #{tpu_custom_call.1} parent=1 // pred_check
      _
    $region27: #{tpu_custom_call.1} parent=1 // pred_check_branch
      %245 = sbr.rel (0) target = $region29
    $region28: #{tpu_custom_call.1} parent=1 // pred_region
      %246 = dma.done [#allocation4], 256
    $region29: #{tpu_custom_call.1} parent=1 // pred_fallthru
      _
    // Predicated region
    $region30: #{tpu_custom_call.1} parent=1 // pred_check
      _
    $region31: #{tpu_custom_call.1} parent=1 // pred_check_branch
      %248 = sbr.rel (0) target = $region33
    $region32: #{tpu_custom_call.1} parent=1 // pred_region
      %249 = dma.done [#allocation7], 256
    $region33: #{tpu_custom_call.1} parent=1 // pred_fallthru
      _
    %250 = vsyncpa [#allocation3], 1
    %251 = vsyncpa [#allocation4], 1
    %252 = vsyncpa [#allocation7], 1

</llo_original>
